<compile_context>
chip_gen: v7x
topology: tpu7x:2x2x1
jax: 0.10.0
libtpu: 0.0.40
codegen_flags: <defaults>
</compile_context>

<pallas_src>
import math

import jax
import jax.numpy as jnp
from jax import lax
from jax.experimental import pallas as pl
from jax.experimental.pallas import tpu as pltpu

EMBED_DIM = 128   # fixed by Task.__init__
NUM_HEADS = 1     # fixed by Task.__init__ default


def _mha_kernel(x_ref, wqkv_ref, wo_ref, bqkv_ref, bo_ref, o_ref):
    Bb, S, E = x_ref.shape
    M = Bb * S

    # One lane-dense fused QKV projection over the whole (Bb*S, E) slab.
    x = x_ref[...].reshape(M, E)                                        # bf16 input
    qkv = jnp.dot(x, wqkv_ref[...], preferred_element_type=jnp.float32)
    qkv = qkv + bqkv_ref[...]                                           # (M, 3E) f32

    # Softmax scale was folded into Wq / bq outside the kernel.
    q = qkv[:, 0 * E:1 * E].reshape(Bb, S, E).astype(jnp.bfloat16)
    k = qkv[:, 1 * E:2 * E].reshape(Bb, S, E).astype(jnp.bfloat16)
    v = qkv[:, 2 * E:3 * E].reshape(Bb, S, E).astype(jnp.bfloat16)

    # Per-sequence scores via a batched contraction: no (M,M) slab, no mask.
    s = lax.dot_general(q, k, (((2,), (2,)), ((0,), (0,))),
                        preferred_element_type=jnp.float32)             # (Bb, S, S)

    # Numerically-stable softmax over the key axis.
    m = jnp.max(s, axis=-1, keepdims=True)
    p = jnp.exp(s - m)
    l = jnp.sum(p, axis=-1, keepdims=True)
    inv_l = pl.reciprocal(l, approx=True)                               # EUP slot

    ctx = lax.dot_general(p.astype(jnp.bfloat16), v,
                          (((2,), (1,)), ((0,), (0,))),
                          preferred_element_type=jnp.float32) * inv_l   # (Bb, S, E)

    out = jnp.dot(ctx.reshape(M, E).astype(jnp.bfloat16), wo_ref[...],
                  preferred_element_type=jnp.float32) + bo_ref[...]     # (M, E)
    o_ref[...] = out.reshape(Bb, S, E).astype(o_ref.dtype)


def _vmem_bytes_estimate(Bb, S, E):
    """Rough per-step VMEM footprint (blocks + weights + live intermediates)."""
    M = Bb * S
    io_blocks = 2 * (M * E * 2) + 2 * (M * E * 4)        # x bf16 / out f32, double-buffered
    weights = 2 * (3 * E * E * 2 + E * E * 2 + 3 * E * 4 + E * 4)
    inter = (M * 3 * E * 4          # qkv f32
             + 3 * M * E * 2        # q,k,v bf16
             + 2 * Bb * S * S * 4   # s, p f32
             + Bb * S * S * 2       # p bf16
             + 2 * M * E * 4        # ctx f32, out f32
             + M * E * 2)           # ctx bf16
    return io_blocks + weights + inter


def _choose_block_batch(B, S, E):
    # Target M = Bb*S ~ 256 rows of MXU work per step (amortize ~0.35us/step).
    bb = max(1, min(B, 256 // max(1, S)))
    # Prefer a Bb that divides B (avoids a padded HBM copy of x).
    d = bb
    while d > 1 and B % d != 0:
        d -= 1
    bb = d
    # Keep >= 2 grid steps when B allows, so both v7x TensorCores get work.
    if B >= 2 and -(-B // bb) < 2:
        bb = max(1, B // 2)
        while bb > 1 and B % bb != 0:
            bb -= 1
    # Stay well under v7x's 64 MiB physical VMEM.
    while bb > 1 and _vmem_bytes_estimate(bb, S, E) > (40 << 20):
        bb = max(1, bb // 2)
    return bb


def grouping_attn_pallas(x, in_proj_w, in_proj_b, out_proj_w, out_proj_b):
    """Single-head batch_first nn.MultiheadAttention forward via Pallas.

    x: (B, S, E) f32.  PyTorch parameter layouts (y = x @ W.T + b):
    in_proj_w: (3E, E), in_proj_b: (3E,), out_proj_w: (E, E), out_proj_b: (E,).
    """
    B, S, E = x.shape
    assert E == EMBED_DIM and NUM_HEADS == 1

    # ---- one-time weight prep (outside the kernel) ----
    scale = 1.0 / math.sqrt(E // NUM_HEADS)
    col_scale = jnp.concatenate([jnp.full((E,), scale, jnp.float32),
                                 jnp.ones((2 * E,), jnp.float32)])
    w_qkv = (in_proj_w.T * col_scale[None, :]).astype(jnp.bfloat16)   # (E, 3E)
    b_qkv = (in_proj_b * col_scale).reshape(1, 3 * E)                 # f32
    w_o = out_proj_w.T.astype(jnp.bfloat16)                           # (E, E)
    b_o = out_proj_b.reshape(1, E)                                    # f32

    # Producer-side bf16 cast: halves the per-step input DMA (kernel used bf16 anyway).
    x_bf = x.astype(jnp.bfloat16)

    Bb = _choose_block_batch(B, S, E)
    Bp = -(-B // Bb) * Bb
    if Bp != B:
        # Rare fallback (Bb is chosen to divide B when possible).
        x_bf = jnp.pad(x_bf, ((0, Bp - B), (0, 0), (0, 0)))
    grid = (Bp // Bb,)

    # TODO(synk): for very long S (>~1K on v7x, >~2K on v5e/v6e) replace the dense
    # (S, S) per-sequence score tile with flash-style KV tiling (online softmax).
    vmem_limit = int(min(64 << 20, max(32 << 20, 2 * _vmem_bytes_estimate(Bb, S, E))))

    out = pl.pallas_call(
        _mha_kernel,
        out_shape=jax.ShapeDtypeStruct((Bp, S, E), x.dtype),
        grid_spec=pltpu.PrefetchScalarGridSpec(
            num_scalar_prefetch=0,
            grid=grid,
            in_specs=[pl.BlockSpec((Bb, S, E), lambda b: (b, 0, 0)),
                      pl.BlockSpec((E, 3 * E), lambda b: (0, 0)),
                      pl.BlockSpec((E, E), lambda b: (0, 0)),
                      pl.BlockSpec((1, 3 * E), lambda b: (0, 0)),
                      pl.BlockSpec((1, E), lambda b: (0, 0))],
            out_specs=pl.BlockSpec((Bb, S, E), lambda b: (b, 0, 0)),
        ),
        compiler_params=pltpu.CompilerParams(
            dimension_semantics=("parallel",),
            vmem_limit_bytes=vmem_limit),
    )(x_bf, w_qkv, w_o, b_qkv, b_o)
    return out[:B]


def choose_indices(ptr, mask_rate, key):
    # Plain-JAX glue reproducing Task.choose_indices semantics (data-dependent
    # ragged random selection; not a Pallas hot path, eager-only).
    # TODO(synk): data-dependent repeat_interleave has no clean static-shape Pallas equivalent.
    sizes = ptr[1:] - ptr[:-1]
    num_hidden = jnp.clip((sizes * mask_rate).astype(jnp.int32), 1)
    hidden_to_batch = jnp.repeat(
        jnp.arange(sizes.shape[0]), num_hidden,
        total_repeat_length=int(jnp.sum(num_hidden)))
    u = jax.random.uniform(key, (hidden_to_batch.shape[0],))
    chosen = (u * sizes[hidden_to_batch]).astype(jnp.int32)
    return chosen + ptr[:-1][hidden_to_batch]


def _reference_mha(x, w_qkv, w_o, b_qkv, b_o):
    E = x.shape[-1]
    qkv = jnp.einsum("bse,ef->bsf", x, w_qkv) + b_qkv
    q, k, v = qkv[..., :E], qkv[..., E:2 * E], qkv[..., 2 * E:]
    s = jnp.einsum("bqe,bke->bqk", q, k) / jnp.sqrt(jnp.float32(E))
    p = jax.nn.softmax(s, axis=-1)
    ctx = jnp.einsum("bqk,bke->bqe", p, v)
    return jnp.einsum("bse,ef->bsf", ctx, w_o) + b_o


if __name__ == "__main__":
    key = jax.random.PRNGKey(0)
    B, S, E = 4, 8, EMBED_DIM

    k_x, k_inw, k_inb, k_ow, k_ob, k_ptr = jax.random.split(key, 6)

    x = jax.random.normal(k_x, (B, S, E), dtype=jnp.float32)

    # nn.MultiheadAttention parameters: in_proj_weight (3E, E), in_proj_bias (3E,),
    # out_proj.weight (E, E), out_proj.bias (E,).  Deterministic init.
    in_proj_w = jax.random.normal(k_inw, (3 * E, E), dtype=jnp.float32) * 0.05
    in_proj_b = jax.random.normal(k_inb, (3 * E,), dtype=jnp.float32) * 0.05
    out_proj_w = jax.random.normal(k_ow, (E, E), dtype=jnp.float32) * 0.05
    out_proj_b = jax.random.normal(k_ob, (E,), dtype=jnp.float32) * 0.05

    out = grouping_attn_pallas(x, in_proj_w, in_proj_b, out_proj_w, out_proj_b)
    out = jax.block_until_ready(out)

    ref = _reference_mha(x, in_proj_w.T, out_proj_w.T,
                         in_proj_b.reshape(1, 3 * E), out_proj_b.reshape(1, E))
    max_err = float(jnp.max(jnp.abs(out - ref)))
    assert jnp.allclose(out, ref, atol=3e-2, rtol=3e-2), f"mismatch vs reference: {max_err}"

    # exercise the choose_indices glue as well (CSR-style ptr for 2 graphs)
    ptr = jnp.array([0, 5, 12], dtype=jnp.int32)
    idx = jax.block_until_ready(choose_indices(ptr, 0.3, k_ptr))
    assert idx.shape[0] >= 2

    print("KERNEL_OK")
</pallas_src>

<mosaic_0001>
module attributes {stable_mosaic.version = 11 : i64} {
  func.func @_mha_kernel(%arg0: i32, %arg1: memref<2x8x128xbf16, #tpu.memory_space<vmem>>, %arg2: memref<128x384xbf16, #tpu.memory_space<vmem>>, %arg3: memref<128x128xbf16, #tpu.memory_space<vmem>>, %arg4: memref<1x384xf32, #tpu.memory_space<vmem>>, %arg5: memref<1x128xf32, #tpu.memory_space<vmem>>, %arg6: memref<2x8x128xf32, #tpu.memory_space<vmem>>) attributes {dimension_semantics = [#tpu.dimension_semantics<parallel>], iteration_bounds = array<i64: 2>, scalar_prefetch = 0 : i64, scratch_operands = 0 : i64, tpu.core_type = #tpu.core_type<tc>, window_params = [{transform_indices = @transform_0, window_bounds = array<i64: 2, 8, 128>}, {pipeline_mode = #tpu.pipeline_mode<synchronous>, transform_indices = @transform_1, window_bounds = array<i64: 128, 384>}, {pipeline_mode = #tpu.pipeline_mode<synchronous>, transform_indices = @transform_2, window_bounds = array<i64: 128, 128>}, {pipeline_mode = #tpu.pipeline_mode<synchronous>, transform_indices = @transform_3, window_bounds = array<i64: 1, 384>}, {pipeline_mode = #tpu.pipeline_mode<synchronous>, transform_indices = @transform_4, window_bounds = array<i64: 1, 128>}, {transform_indices = @transform_5, window_bounds = array<i64: 2, 8, 128>}]} {
    %c0 = arith.constant 0 : index
    %c0_0 = arith.constant 0 : index
    %c0_1 = arith.constant 0 : index
    %0 = vector.load %arg1[%c0, %c0_0, %c0_1] : memref<2x8x128xbf16, #tpu.memory_space<vmem>>, vector<2x8x128xbf16>
    %1 = vector.shape_cast %0 : vector<2x8x128xbf16> to vector<16x128xbf16>
    %c0_2 = arith.constant 0 : index
    %c0_3 = arith.constant 0 : index
    %2 = vector.load %arg2[%c0_2, %c0_3] : memref<128x384xbf16, #tpu.memory_space<vmem>>, vector<128x384xbf16>
    %cst = arith.constant dense<0.000000e+00> : vector<16x384xf32>
    %3 = tpu.matmul %1, %2, %cst {dimension_numbers = #tpu.dot_dimension_numbers<[1], [0], [0], [1], [0, 0, 1, 1], [], []>} : vector<16x128xbf16>, vector<128x384xbf16>, vector<16x384xf32> -> vector<16x384xf32>
    %c0_4 = arith.constant 0 : index
    %c0_5 = arith.constant 0 : index
    %4 = vector.load %arg4[%c0_4, %c0_5] : memref<1x384xf32, #tpu.memory_space<vmem>>, vector<1x384xf32>
    %5 = vector.broadcast %4 : vector<1x384xf32> to vector<16x384xf32>
    %6 = arith.addf %3, %5 : vector<16x384xf32>
    %7 = vector.extract_strided_slice %6 {offsets = [0, 0], sizes = [16, 128], strides = [1, 1]} : vector<16x384xf32> to vector<16x128xf32>
    %8 = vector.shape_cast %7 : vector<16x128xf32> to vector<2x8x128xf32>
    %9 = arith.truncf %8 : vector<2x8x128xf32> to vector<2x8x128xbf16>
    %10 = vector.extract_strided_slice %6 {offsets = [0, 128], sizes = [16, 128], strides = [1, 1]} : vector<16x384xf32> to vector<16x128xf32>
    %11 = vector.shape_cast %10 : vector<16x128xf32> to vector<2x8x128xf32>
    %12 = arith.truncf %11 : vector<2x8x128xf32> to vector<2x8x128xbf16>
    %13 = vector.extract_strided_slice %6 {offsets = [0, 256], sizes = [16, 128], strides = [1, 1]} : vector<16x384xf32> to vector<16x128xf32>
    %14 = vector.shape_cast %13 : vector<16x128xf32> to vector<2x8x128xf32>
    %15 = arith.truncf %14 : vector<2x8x128xf32> to vector<2x8x128xbf16>
    %cst_6 = arith.constant dense<0.000000e+00> : vector<2x8x8xf32>
    %16 = tpu.matmul %9, %12, %cst_6 {dimension_numbers = #tpu.dot_dimension_numbers<[2], [2], [1], [1], [0, 0, 0, 1, 1, 1], [0], [0]>} : vector<2x8x128xbf16>, vector<2x8x128xbf16>, vector<2x8x8xf32> -> vector<2x8x8xf32>
    %cst_7 = arith.constant dense<0xFF800000> : vector<2x8xf32>
    %17 = vector.multi_reduction <maximumf>, %16, %cst_7 [2] : vector<2x8x8xf32> to vector<2x8xf32>
    %18 = vector.shape_cast %17 : vector<2x8xf32> to vector<2x8x1xf32>
    %19 = vector.broadcast %18 : vector<2x8x1xf32> to vector<2x8x8xf32>
    %20 = arith.subf %16, %19 : vector<2x8x8xf32>
    %21 = math.exp %20 : vector<2x8x8xf32>
    %cst_8 = arith.constant dense<0.000000e+00> : vector<2x8xf32>
    %22 = vector.multi_reduction <add>, %21, %cst_8 [2] : vector<2x8x8xf32> to vector<2x8xf32>
    %23 = vector.shape_cast %22 : vector<2x8xf32> to vector<2x8x1xf32>
    %24 = tpu.reciprocal %23 {approx = true} : vector<2x8x1xf32> -> vector<2x8x1xf32>
    %25 = arith.truncf %21 : vector<2x8x8xf32> to vector<2x8x8xbf16>
    %cst_9 = arith.constant dense<0.000000e+00> : vector<2x8x128xf32>
    %26 = tpu.matmul %25, %15, %cst_9 {dimension_numbers = #tpu.dot_dimension_numbers<[2], [1], [1], [2], [0, 0, 0, 1, 1, 2], [0], [0]>} : vector<2x8x8xbf16>, vector<2x8x128xbf16>, vector<2x8x128xf32> -> vector<2x8x128xf32>
    %27 = vector.broadcast %24 : vector<2x8x1xf32> to vector<2x8x128xf32>
    %28 = arith.mulf %26, %27 : vector<2x8x128xf32>
    %29 = vector.shape_cast %28 : vector<2x8x128xf32> to vector<16x128xf32>
    %30 = arith.truncf %29 : vector<16x128xf32> to vector<16x128xbf16>
    %c0_10 = arith.constant 0 : index
    %c0_11 = arith.constant 0 : index
    %31 = vector.load %arg3[%c0_10, %c0_11] : memref<128x128xbf16, #tpu.memory_space<vmem>>, vector<128x128xbf16>
    %cst_12 = arith.constant dense<0.000000e+00> : vector<16x128xf32>
    %32 = tpu.matmul %30, %31, %cst_12 {dimension_numbers = #tpu.dot_dimension_numbers<[1], [0], [0], [1], [0, 0, 1, 1], [], []>} : vector<16x128xbf16>, vector<128x128xbf16>, vector<16x128xf32> -> vector<16x128xf32>
    %c0_13 = arith.constant 0 : index
    %c0_14 = arith.constant 0 : index
    %33 = vector.load %arg5[%c0_13, %c0_14] : memref<1x128xf32, #tpu.memory_space<vmem>>, vector<1x128xf32>
    %34 = vector.broadcast %33 : vector<1x128xf32> to vector<16x128xf32>
    %35 = arith.addf %32, %34 : vector<16x128xf32>
    %36 = vector.shape_cast %35 : vector<16x128xf32> to vector<2x8x128xf32>
    %c0_15 = arith.constant 0 : index
    %c0_16 = arith.constant 0 : index
    %c0_17 = arith.constant 0 : index
    %37 = vector.load %arg6[%c0_15, %c0_16, %c0_17] : memref<2x8x128xf32, #tpu.memory_space<vmem>>, vector<2x8x128xf32>
    tpu.vector_store %arg6[%c0_15, %c0_16, %c0_17], %36 {strides = array<i32>} : memref<2x8x128xf32, #tpu.memory_space<vmem>>, vector<2x8x128xf32>,
    return
  }
  func.func @transform_0(%arg0: i32) -> (i32, i32, i32) {
    %c0_i32 = arith.constant 0 : i32
    %c0_i32_0 = arith.constant 0 : i32
    %c0_i32_1 = arith.constant 0 : i32
    return %arg0, %c0_i32, %c0_i32_0 : i32, i32, i32
  }
  func.func @transform_1(%arg0: i32) -> (i32, i32) {
    %c0_i32 = arith.constant 0 : i32
    %c0_i32_0 = arith.constant 0 : i32
    %c0_i32_1 = arith.constant 0 : i32
    return %c0_i32, %c0_i32_0 : i32, i32
  }
  func.func @transform_2(%arg0: i32) -> (i32, i32) {
    %c0_i32 = arith.constant 0 : i32
    %c0_i32_0 = arith.constant 0 : i32
    %c0_i32_1 = arith.constant 0 : i32
    return %c0_i32, %c0_i32_0 : i32, i32
  }
  func.func @transform_3(%arg0: i32) -> (i32, i32) {
    %c0_i32 = arith.constant 0 : i32
    %c0_i32_0 = arith.constant 0 : i32
    %c0_i32_1 = arith.constant 0 : i32
    return %c0_i32, %c0_i32_0 : i32, i32
  }
  func.func @transform_4(%arg0: i32) -> (i32, i32) {
    %c0_i32 = arith.constant 0 : i32
    %c0_i32_0 = arith.constant 0 : i32
    %c0_i32_1 = arith.constant 0 : i32
    return %c0_i32, %c0_i32_0 : i32, i32
  }
  func.func @transform_5(%arg0: i32) -> (i32, i32, i32) {
    %c0_i32 = arith.constant 0 : i32
    %c0_i32_0 = arith.constant 0 : i32
    %c0_i32_1 = arith.constant 0 : i32
    return %arg0, %c0_i32, %c0_i32_0 : i32, i32, i32
  }
}

</mosaic_0001>

<llo_original>
// kernel: tpu_custom_call.1
$region0: #{tpu_custom_call.1}
  #allocation0 [shape = 'u32[]', space=smem, size = 0x4, offset = 0x4, fixed_abs, tag = 'smem constant byte address 0x4 - core index']
  #allocation1 [shape = 'u32[144,128]{1,0:T(1,128)}', space=vmem, size = 0x12000, scoped, tag = 'internal scratch']
  %s0 = inlined_call_operand.hbm [shape: bf16[4,8,128], index: 0, kind: input, shape index: {}]
  %s1 = inlined_call_operand.hbm [shape: bf16[128,384], index: 1, kind: input, shape index: {}]
  %s2 = inlined_call_operand.hbm [shape: bf16[128,128], index: 2, kind: input, shape index: {}]
  %s3 = inlined_call_operand.vmem [shape: f32[1,384], index: 3, kind: input, shape index: {}]
  %s4 = inlined_call_operand.vmem [shape: f32[1,128], index: 4, kind: input, shape index: {}]
  %s5 = inlined_call_operand.hbm [shape: f32[4,8,128], index: 5, kind: output, shape index: {}]
  %s6 = sld [smem:[#allocation0]]
  $region65: #{tpu_custom_call.1} parent=0
    _
  %s8 = ssub.s32 1, %s6
  %s9 = scalar_select 0, %s8, %s6
  $region1: #{tpu_custom_call.1} parent=0
    #allocation2 [shape = 'u8[8192]{0}', space=vmem, size = 0x2000, scoped, tag = 'input window, operand 0']
    #allocation3 [shape = 's32[2]{0}', space=sflag, size = 0x8, scoped, tag = 'scoped memory for tpu_custom_call.1']
    #allocation4 [shape = 's32[2]{0}', space=sflag, size = 0x8, scoped, tag = 'scoped memory for tpu_custom_call.1']
    #allocation5 [shape = 'u8[98304]{0}', space=vmem, size = 0x18000, scoped, tag = 'input window, operand 1, single buffered']
    #allocation6 [shape = 's32[1]{0}', space=sflag, size = 0x4, scoped, tag = 'scoped memory for tpu_custom_call.1']
    #allocation7 [shape = 'u8[32768]{0}', space=vmem, size = 0x8000, scoped, tag = 'input window, operand 2, single buffered']
    #allocation8 [shape = 'u8[16384]{0}', space=vmem, size = 0x4000, scoped, tag = 'output window, operand 0']
    %10 = vsyncpa [#allocation3], 0
    %s11 = scalar_lea.sflag [#allocation3], 1
    %12 = vsyncpa %s11, 0
    %13 = vsyncpa [#allocation6], 0
    %14 = vsyncpa [#allocation4], 0
    %s15 = scalar_lea.sflag [#allocation4], 1
    %16 = vsyncpa %s15, 0
    loop: start=0, step=1, limit=4
    $region2: #{tpu_custom_call.1} parent=1 // loop_pre_header
      _
    $region3: #{tpu_custom_call.1} parent=1 // loop_header
      %s18 = sphi 0, %s22
      %p19 = scmp.ge.s32.totalorder %s18, 4
      %s28 = sphi 0, %s30
      %s31 = sphi 0, %s28
      %s32 = sphi 0, %s31
      %s48 = sphi 0, %s32
      %s52 = sphi 0, %s52
      %s54 = sphi 0, %s52
      %s55 = sphi 0, %s54
      %s69 = sphi 0, %s55
      %s73 = sphi 0, %s73
      %s75 = sphi 0, %s73
      %s76 = sphi 0, %s75
      %s90 = sphi 0, %s76
      %s94 = sphi 0, %s94
      %s96 = sphi 0, %s94
      %s97 = sphi 0, %s96
      %s111 = sphi 0, %s97
      %s115 = sphi 0, %s115
      %s117 = sphi 0, %s115
      %s118 = sphi 0, %s117
      %s132 = sphi 0, %s118
      %s138 = sphi 0, %s140
      %s141 = sphi 0, %s138
      %s142 = sphi 0, %s141
      %s158 = sphi 0, %s142
    $region4: #{tpu_custom_call.1} parent=1 // loop_header_branch
      %21 = sbr.rel (%p19) target = $region8
    $region5: #{tpu_custom_call.1} parent=1 // loop_body
      %s23 = ssub.s32 %s18, 1
      %s24 = ssub.s32 %s18, 2
      %s25 = sadd.s32 %s18, 1
      %s26 = ssub.s32 %s18, %s25
      %p27 = scmp.eq.s32.totalorder %s26, 0
      %s29 = sadd.s32 %s28, 1
      %s30 = scalar_select %p27, %s28, %s29
      %p33 = pneg %p27
      %p34 = scmp.eq.s32.totalorder %s18, 1
      %p35 = por %p33, %p34
      %p36 = scmp.ne.s32.totalorder %s28, %s31
      %p37 = scmp.eq.s32.totalorder %s18, 0
      %p38 = por %p36, %p37
      %p39 = scmp.ne.s32.totalorder %s28, %s31
      %p40 = scmp.eq.s32.totalorder %s23, 1
      %p41 = por %p39, %p40
      %p42 = scmp.ne.s32.totalorder %s31, %s32
      %p43 = scmp.eq.s32.totalorder %s23, 0
      %p44 = por %p42, %p43
      %p45 = scmp.ne.s32.totalorder %s31, %s32
      %p46 = scmp.eq.s32.totalorder %s24, 1
      %p47 = por %p45, %p46
      %p49 = scmp.ne.s32.totalorder %s32, %s48
      %p50 = scmp.eq.s32.totalorder %s24, 0
      %p51 = por %p49, %p50
      %s53 = sadd.s32 %s52, 1
      %p56 = scmp.eq.s32.totalorder %s18, 1
      %p57 = scmp.ne.s32.totalorder %s52, %s54
      %p58 = scmp.eq.s32.totalorder %s18, 0
      %p59 = por %p57, %p58
      %p60 = scmp.ne.s32.totalorder %s52, %s54
      %p61 = scmp.eq.s32.totalorder %s23, 1
      %p62 = por %p60, %p61
      %p63 = scmp.ne.s32.totalorder %s54, %s55
      %p64 = scmp.eq.s32.totalorder %s23, 0
      %p65 = por %p63, %p64
      %p66 = scmp.ne.s32.totalorder %s54, %s55
      %p67 = scmp.eq.s32.totalorder %s24, 1
      %p68 = por %p66, %p67
      %p70 = scmp.ne.s32.totalorder %s55, %s69
      %p71 = scmp.eq.s32.totalorder %s24, 0
      %p72 = por %p70, %p71
      %s74 = sadd.s32 %s73, 1
      %p77 = scmp.eq.s32.totalorder %s18, 1
      %p78 = scmp.ne.s32.totalorder %s73, %s75
      %p79 = scmp.eq.s32.totalorder %s18, 0
      %p80 = por %p78, %p79
      %p81 = scmp.ne.s32.totalorder %s73, %s75
      %p82 = scmp.eq.s32.totalorder %s23, 1
      %p83 = por %p81, %p82
      %p84 = scmp.ne.s32.totalorder %s75, %s76
      %p85 = scmp.eq.s32.totalorder %s23, 0
      %p86 = por %p84, %p85
      %p87 = scmp.ne.s32.totalorder %s75, %s76
      %p88 = scmp.eq.s32.totalorder %s24, 1
      %p89 = por %p87, %p88
      %p91 = scmp.ne.s32.totalorder %s76, %s90
      %p92 = scmp.eq.s32.totalorder %s24, 0
      %p93 = por %p91, %p92
      %s95 = sadd.s32 %s94, 1
      %p98 = scmp.eq.s32.totalorder %s18, 1
      %p99 = scmp.ne.s32.totalorder %s94, %s96
      %p100 = scmp.eq.s32.totalorder %s18, 0
      %p101 = por %p99, %p100
      %p102 = scmp.ne.s32.totalorder %s94, %s96
      %p103 = scmp.eq.s32.totalorder %s23, 1
      %p104 = por %p102, %p103
      %p105 = scmp.ne.s32.totalorder %s96, %s97
      %p106 = scmp.eq.s32.totalorder %s23, 0
      %p107 = por %p105, %p106
      %p108 = scmp.ne.s32.totalorder %s96, %s97
      %p109 = scmp.eq.s32.totalorder %s24, 1
      %p110 = por %p108, %p109
      %p112 = scmp.ne.s32.totalorder %s97, %s111
      %p113 = scmp.eq.s32.totalorder %s24, 0
      %p114 = por %p112, %p113
      %s116 = sadd.s32 %s115, 1
      %p119 = scmp.eq.s32.totalorder %s18, 1
      %p120 = scmp.ne.s32.totalorder %s115, %s117
      %p121 = scmp.eq.s32.totalorder %s18, 0
      %p122 = por %p120, %p121
      %p123 = scmp.ne.s32.totalorder %s115, %s117
      %p124 = scmp.eq.s32.totalorder %s23, 1
      %p125 = por %p123, %p124
      %p126 = scmp.ne.s32.totalorder %s117, %s118
      %p127 = scmp.eq.s32.totalorder %s23, 0
      %p128 = por %p126, %p127
      %p129 = scmp.ne.s32.totalorder %s117, %s118
      %p130 = scmp.eq.s32.totalorder %s24, 1
      %p131 = por %p129, %p130
      %p133 = scmp.ne.s32.totalorder %s118, %s132
      %p134 = scmp.eq.s32.totalorder %s24, 0
      %p135 = por %p133, %p134
      %s136 = ssub.s32 %s18, %s25
      %p137 = scmp.eq.s32.totalorder %s136, 0
      %s139 = sadd.s32 %s138, 1
      %s140 = scalar_select %p137, %s138, %s139
      %p143 = pneg %p137
      %p144 = scmp.eq.s32.totalorder %s18, 1
      %p145 = por %p143, %p144
      %p146 = scmp.ne.s32.totalorder %s138, %s141
      %p147 = scmp.eq.s32.totalorder %s18, 0
      %p148 = por %p146, %p147
      %p149 = scmp.ne.s32.totalorder %s138, %s141
      %p150 = scmp.eq.s32.totalorder %s23, 1
      %p151 = por %p149, %p150
      %p152 = scmp.ne.s32.totalorder %s141, %s142
      %p153 = scmp.eq.s32.totalorder %s23, 0
      %p154 = por %p152, %p153
      %p155 = scmp.ne.s32.totalorder %s141, %s142
      %p156 = scmp.eq.s32.totalorder %s24, 1
      %p157 = por %p155, %p156
      %p159 = scmp.ne.s32.totalorder %s142, %s158
      %p160 = scmp.eq.s32.totalorder %s24, 0
      %p161 = por %p159, %p160
      %p162 = scmp.le.s32.totalorder 1, %s18
      %p163 = scmp.lt.s32.totalorder %s18, 3
      %p164 = pnand %p162, %p163
      %p165 = pneg %p164
      // Predicated region
      $region9: #{tpu_custom_call.1} parent=5 // pred_check
        _
      $region10: #{tpu_custom_call.1} parent=5 // pred_check_branch
        %167 = sbr.rel (%p164) target = $region12
      $region11: #{tpu_custom_call.1} parent=5 // pred_region
        %s168 = ssub.s32 %s18, 1
        // Predicated region
        $region13: #{tpu_custom_call.1} parent=11 // pred_check
          %p169 = pneg %p65
        $region14: #{tpu_custom_call.1} parent=11 // pred_check_branch
          %171 = sbr.rel (%p169) target = $region16
        $region15: #{tpu_custom_call.1} parent=11 // pred_region
          %s173 = ssub.s32 3072, 3072
          %174 = vsyncadd [#allocation6], %s173
          %s175 = sshll.u32 [#allocation5], 4
          %s176 = int_to_ptr.vmem [resolvable:$true] %s175
          %181 = dma.hbm_to_vmem [thread:$0]  %s1, 3072, %s176, [#allocation6], 192, 192, 12
        $region16: #{tpu_custom_call.1} parent=11 // pred_fallthru
          _
        // Predicated region
        $region17: #{tpu_custom_call.1} parent=11 // pred_check
          %p182 = pneg %p86
        $region18: #{tpu_custom_call.1} parent=11 // pred_check_branch
          %184 = sbr.rel (%p182) target = $region20
        $region19: #{tpu_custom_call.1} parent=11 // pred_region
          %s186 = ssub.s32 1024, 1024
          %187 = vsyncadd [#allocation6], %s186
          %s188 = sshll.u32 [#allocation7], 4
          %s189 = int_to_ptr.vmem [resolvable:$true] %s188
          %194 = dma.hbm_to_vmem [thread:$0]  %s2, 1024, %s189, [#allocation6], 64, 64, 4
        $region20: #{tpu_custom_call.1} parent=11 // pred_fallthru
          _
        // Predicated region
        $region21: #{tpu_custom_call.1} parent=11 // pred_check
          %p195 = pneg %p107
        $region22: #{tpu_custom_call.1} parent=11 // pred_check_branch
          %197 = sbr.rel (%p195) target = $region24
        $region23: #{tpu_custom_call.1} parent=11 // pred_region
          _
        $region24: #{tpu_custom_call.1} parent=11 // pred_fallthru
          _
        // Predicated region
        $region25: #{tpu_custom_call.1} parent=11 // pred_check
          %p198 = pneg %p128
        $region26: #{tpu_custom_call.1} parent=11 // pred_check_branch
          %200 = sbr.rel (%p198) target = $region28
        $region27: #{tpu_custom_call.1} parent=11 // pred_region
          _
        $region28: #{tpu_custom_call.1} parent=11 // pred_fallthru
          _
      $region12: #{tpu_custom_call.1} parent=5 // pred_fallthru
        _
      %p201 = scmp.lt.s32.totalorder %s18, 2
      // Predicated region
      $region29: #{tpu_custom_call.1} parent=5 // pred_check
        %p202 = pneg %p201
      $region30: #{tpu_custom_call.1} parent=5 // pred_check_branch
        %204 = sbr.rel (%p202) target = $region32
      $region31: #{tpu_custom_call.1} parent=5 // pred_region
        // Predicated region
        $region33: #{tpu_custom_call.1} parent=31 // pred_check
          %p205 = pneg %p38
        $region34: #{tpu_custom_call.1} parent=31 // pred_check_branch
          %207 = sbr.rel (%p205) target = $region36
        $region35: #{tpu_custom_call.1} parent=31 // pred_region
          %s208 = sand.u32 %s28, 1
          %s209 = scalar_lea.sflag [#allocation3], %s208
          %s210 = sand.u32 %s28, 1
          %s211 = smul.addr %s210, 8
          %s212 = scalar_lea.vmem [#allocation2], %s211
          %s213 = smul.u32 2, %s18
          %s215 = ssub.s32 128, 128
          %216 = vsyncadd %s209, %s215
          %s217 = smul.addr %s213, 64
          %s218 = scalar_lea.hbm %s0, %s217
          %s219 = sshll.u32 %s212, 4
          %s220 = int_to_ptr.vmem [resolvable:$true] %s219
          %225 = dma.hbm_to_vmem [thread:$0]  %s218, 128, %s220, %s209, 64, 64, 4
        $region36: #{tpu_custom_call.1} parent=31 // pred_fallthru
          _
      $region32: #{tpu_custom_call.1} parent=5 // pred_fallthru
        _
      %p226 = scmp.le.s32.totalorder 1, %s18
      %p227 = scmp.lt.s32.totalorder %s18, 3
      %p228 = pnand %p226, %p227
      %p229 = pneg %p228
      // Predicated region
      $region37: #{tpu_custom_call.1} parent=5 // pred_check
        _
      $region38: #{tpu_custom_call.1} parent=5 // pred_check_branch
        %231 = sbr.rel (%p228) target = $region40
      $region39: #{tpu_custom_call.1} parent=5 // pred_region
        %s232 = ssub.s32 %s18, 1
        %s233 = sand.u32 %s31, 1
        %s234 = scalar_lea.sflag [#allocation3], %s233
        %s235 = sand.u32 %s31, 1
        %s236 = smul.addr %s235, 8
        %s237 = scalar_lea.vmem [#allocation2], %s236
        // Predicated region
        $region41: #{tpu_custom_call.1} parent=39 // pred_check
          %p238 = pneg %p44
        $region42: #{tpu_custom_call.1} parent=39 // pred_check_branch
          %240 = sbr.rel (%p238) target = $region44
        $region43: #{tpu_custom_call.1} parent=39 // pred_region
          %241 = dma.done %s234, 128
        $region44: #{tpu_custom_call.1} parent=39 // pred_fallthru
          _
        // Predicated region
        $region45: #{tpu_custom_call.1} parent=39 // pred_check
          %p242 = pneg %p65
        $region46: #{tpu_custom_call.1} parent=39 // pred_check_branch
          %244 = sbr.rel (%p242) target = $region48
        $region47: #{tpu_custom_call.1} parent=39 // pred_region
          %245 = dma.done [#allocation6], 3072
        $region48: #{tpu_custom_call.1} parent=39 // pred_fallthru
          _
        // Predicated region
        $region49: #{tpu_custom_call.1} parent=39 // pred_check
          %p246 = pneg %p86
        $region50: #{tpu_custom_call.1} parent=39 // pred_check_branch
          %248 = sbr.rel (%p246) target = $region52
        $region51: #{tpu_custom_call.1} parent=39 // pred_region
          %249 = dma.done [#allocation6], 1024
        $region52: #{tpu_custom_call.1} parent=39 // pred_fallthru
          _
        %s250 = sand.u32 %s31, 1
        %s251 = scalar_lea.sflag [#allocation3], %s250
        %s252 = sand.u32 %s31, 1
        %s253 = smul.addr %s252, 8
        %s254 = scalar_lea.vmem [#allocation2], %s253
        %p255 = pneg %p44
        %p256 = pneg %p41
        %p257 = pneg %p65
        %p258 = pneg %p62
        %p259 = pneg %p86
        %p260 = pneg %p83
        %p261 = pneg %p107
        %p262 = pneg %p104
        %p263 = pneg %p128
        %p264 = pneg %p125
        %p265 = pneg %p154
        %p266 = pneg %p151
        %s267 = sand.u32 %s141, 1
        %s268 = scalar_lea.sflag [#allocation4], %s267
        %s269 = sand.u32 %s141, 1
        %s270 = smul.addr %s269, 16
        %s271 = scalar_lea.vmem [#allocation8], %s270
        %s272 = smul.u32 2, %s23
        %s273 = smul.u32 2, %s23
        %v275 = vld [vmem:[%s237] sm:$0xf]
        %v276 = vld [vmem:[%s237 + $0x4] sm:$0xf]
        %v277 = vld [vmem:[#allocation5] sm:$0xff]
        %v278 = vld [vmem:[#allocation5 + $0x8] sm:$0xf]
        %v279 = vld [vmem:[#allocation5 + $0xc] sm:$0xff]
        %v280 = vld [vmem:[#allocation5 + $0x14] sm:$0xf]
        %v281 = vld [vmem:[#allocation5 + $0x18] sm:$0xff]
        %v282 = vld [vmem:[#allocation5 + $0x20] sm:$0xf]
        %v283 = vld [vmem:[#allocation5 + $0x24] sm:$0xff]
        %v284 = vld [vmem:[#allocation5 + $0x2c] sm:$0xf]
        %v285 = vld [vmem:[#allocation5 + $0x30] sm:$0xff]
        %v286 = vld [vmem:[#allocation5 + $0x38] sm:$0xf]
        %v287 = vld [vmem:[#allocation5 + $0x3c] sm:$0xff]
        %v288 = vld [vmem:[#allocation5 + $0x44] sm:$0xf]
        %v289 = vld [vmem:[#allocation5 + $0x48] sm:$0xff]
        %v290 = vld [vmem:[#allocation5 + $0x50] sm:$0xf]
        %v291 = vld [vmem:[#allocation5 + $0x54] sm:$0xff]
        %v292 = vld [vmem:[#allocation5 + $0x5c] sm:$0xf]
        %v293 = vld [vmem:[#allocation5 + $0x60] sm:$0xff]
        %v294 = vld [vmem:[#allocation5 + $0x68] sm:$0xf]
        %v295 = vld [vmem:[#allocation5 + $0x6c] sm:$0xff]
        %v296 = vld [vmem:[#allocation5 + $0x74] sm:$0xf]
        %v297 = vld [vmem:[#allocation5 + $0x78] sm:$0xff]
        %v298 = vld [vmem:[#allocation5 + $0x80] sm:$0xf]
        %v299 = vld [vmem:[#allocation5 + $0x84] sm:$0xff]
        %v300 = vld [vmem:[#allocation5 + $0x8c] sm:$0xf]
        %v301 = vld [vmem:[#allocation5 + $0x90] sm:$0xff]
        %v302 = vld [vmem:[#allocation5 + $0x98] sm:$0xf]
        %v303 = vld [vmem:[#allocation5 + $0x9c] sm:$0xff]
        %v304 = vld [vmem:[#allocation5 + $0xa4] sm:$0xf]
        %v305 = vld [vmem:[#allocation5 + $0xa8] sm:$0xff]
        %v306 = vld [vmem:[#allocation5 + $0xb0] sm:$0xf]
        %v307 = vld [vmem:[#allocation5 + $0xb4] sm:$0xff]
        %v308 = vld [vmem:[#allocation5 + $0xbc] sm:$0xf]
        %v309 = vld [vmem:[%s3] sm:$0x7]
        %v311 = vlaneseq
        %v312 = vshrl.u32 %v311, 7
        %v313 = vsub.s32 0, %v312
        %v314 = vrot.slane %v309, %v313
        %v315 = vlaneseq
        %v316 = vshrl.u32 %v315, 7
        %v317 = vsub.s32 1, %v316
        %v318 = vrot.slane %v309, %v317
        %v319 = vlaneseq
        %v320 = vshrl.u32 %v319, 7
        %v321 = vsub.s32 2, %v320
        %v322 = vrot.slane %v309, %v321
        %v328 = vunpack.c.l.b16 %v275
        %v329 = vunpack.c.l.b16 %v276
        %v330 = vpack.c.b16 %v329, %v328
        %v364 = vunpack.c.l.b16 %v277
        %v365 = vunpack.c.h.b16 %v277
        %v366 = vunpack.c.l.b16 %v278
        %v367 = vunpack.c.l.b16 %v279
        %v368 = vunpack.c.h.b16 %v279
        %v369 = vunpack.c.l.b16 %v280
        %v370 = vunpack.c.l.b16 %v281
        %v371 = vunpack.c.h.b16 %v281
        %v372 = vunpack.c.l.b16 %v282
        %v373 = vunpack.c.l.b16 %v283
        %v374 = vunpack.c.h.b16 %v283
        %v375 = vunpack.c.l.b16 %v284
        %v376 = vunpack.c.l.b16 %v285
        %v377 = vunpack.c.h.b16 %v285
        %v378 = vunpack.c.l.b16 %v286
        %v379 = vunpack.c.l.b16 %v287
        %v380 = vunpack.c.h.b16 %v287
        %v381 = vunpack.c.l.b16 %v288
        %v382 = vunpack.c.l.b16 %v289
        %v383 = vunpack.c.h.b16 %v289
        %v384 = vunpack.c.l.b16 %v290
        %v385 = vunpack.c.l.b16 %v291
        %v386 = vunpack.c.h.b16 %v291
        %v387 = vunpack.c.l.b16 %v292
        %v388 = vunpack.c.l.b16 %v293
        %v389 = vunpack.c.h.b16 %v293
        %v390 = vunpack.c.l.b16 %v294
        %v391 = vunpack.c.l.b16 %v295
        %v392 = vunpack.c.h.b16 %v295
        %v393 = vunpack.c.l.b16 %v296
        %v394 = vunpack.c.l.b16 %v297
        %v395 = vunpack.c.h.b16 %v297
        %v396 = vunpack.c.l.b16 %v298
        %v397 = vunpack.c.l.b16 %v299
        %v398 = vunpack.c.h.b16 %v299
        %v399 = vunpack.c.l.b16 %v300
        %v400 = vunpack.c.l.b16 %v301
        %v401 = vunpack.c.h.b16 %v301
        %v402 = vunpack.c.l.b16 %v302
        %v403 = vunpack.c.l.b16 %v303
        %v404 = vunpack.c.h.b16 %v303
        %v405 = vunpack.c.l.b16 %v304
        %v406 = vunpack.c.l.b16 %v305
        %v407 = vunpack.c.h.b16 %v305
        %v408 = vunpack.c.l.b16 %v306
        %v409 = vunpack.c.l.b16 %v307
        %v410 = vunpack.c.h.b16 %v307
        %v411 = vunpack.c.l.b16 %v308
        %v412 = vpack.c.b16 %v367, %v364
        %v413 = vpack.c.b16 %v368, %v365
        %v414 = vpack.c.b16 %v369, %v366
        %v415 = vpack.c.b16 %v373, %v370
        %v416 = vpack.c.b16 %v374, %v371
        %v417 = vpack.c.b16 %v375, %v372
        %v418 = vpack.c.b16 %v379, %v376
        %v419 = vpack.c.b16 %v380, %v377
        %v420 = vpack.c.b16 %v381, %v378
        %v421 = vpack.c.b16 %v385, %v382
        %v422 = vpack.c.b16 %v386, %v383
        %v423 = vpack.c.b16 %v387, %v384
        %v424 = vpack.c.b16 %v391, %v388
        %v425 = vpack.c.b16 %v392, %v389
        %v426 = vpack.c.b16 %v393, %v390
        %v427 = vpack.c.b16 %v397, %v394
        %v428 = vpack.c.b16 %v398, %v395
        %v429 = vpack.c.b16 %v399, %v396
        %v430 = vpack.c.b16 %v403, %v400
        %v431 = vpack.c.b16 %v404, %v401
        %v432 = vpack.c.b16 %v405, %v402
        %v433 = vpack.c.b16 %v409, %v406
        %v434 = vpack.c.b16 %v410, %v407
        %v435 = vpack.c.b16 %v411, %v408
        %460 = vmatprep.subr.bf16.mxu0 %v413
        %461 = vmatpush1.bf16.msra.mxu0 %v412
        %462 = vmatprep.subr.bf16.mxu0 %v416
        %463 = vmatpush1.bf16.msra.mxu0 %v415
        %464 = vmatprep.subr.bf16.mxu0 %v419
        %465 = vmatpush1.bf16.msra.mxu0 %v418
        %466 = vmatprep.subr.bf16.mxu0 %v422
        %467 = vmatpush1.bf16.msra.mxu0 %v421
        %468 = vmatprep.subr.bf16.mxu0 %v425
        %469 = vmatpush1.bf16.msra.mxu0 %v424
        %470 = vmatprep.subr.bf16.mxu0 %v428
        %471 = vmatpush1.bf16.msra.mxu0 %v427
        %472 = vmatprep.subr.bf16.mxu0 %v431
        %473 = vmatpush1.bf16.msra.mxu0 %v430
        %474 = vmatprep.subr.bf16.mxu0 %v434
        %475 = vmatpush1.bf16.msra.mxu0 %v433
        %476 = vmatprep.subr.bf16.mxu0 0
        %477 = vmatpush1.bf16.msra.mxu0 0
        %478 = vmatprep.subr.bf16.mxu0 0
        %479 = vmatpush1.bf16.msra.mxu0 0
        %480 = vmatprep.subr.bf16.mxu0 0
        %481 = vmatpush1.bf16.msra.mxu0 0
        %482 = vmatprep.subr.bf16.mxu0 0
        %483 = vmatpush1.bf16.msra.mxu0 0
        %484 = vmatprep.subr.bf16.mxu0 0
        %485 = vmatpush1.bf16.msra.mxu0 0
        %486 = vmatprep.subr.bf16.mxu0 0
        %487 = vmatpush1.bf16.msra.mxu0 0
        %488 = vmatprep.subr.bf16.mxu0 0
        %489 = vmatpush1.bf16.msra.mxu0 0
        %490 = vmatprep.subr.bf16.mxu0 0
        %491 = vmatpush1.bf16.msra.mxu0 0
        %492 = vmatprep.mubr.bf16.mxu0 0
        %493 = vmatmul.mubr.bf16.gmra.mrb[0].mxu0 %v330
        %v494 = vpop.f32.mrb[0].mxu0
        %v495 = vadd.f32 %v314, %v494
        %v496 = vpop.f32.mrb[0].mxu0
        %v497 = vadd.f32 %v318, %v496
        %v498 = vpop.f32.mrb[0].mxu0
        %v499 = vadd.f32 %v314, %v498
        %v500 = vpop.f32.mrb[0].mxu0
        %v501 = vadd.f32 %v318, %v500
        %502 = vdwg.mxu0
        %503 = vmatprep.subr.bf16.mxu0 0
        %504 = vmatpush1.bf16.msra.mxu0 %v414
        %505 = vmatprep.subr.bf16.mxu0 0
        %506 = vmatpush1.bf16.msra.mxu0 %v417
        %507 = vmatprep.subr.bf16.mxu0 0
        %508 = vmatpush1.bf16.msra.mxu0 %v420
        %509 = vmatprep.subr.bf16.mxu0 0
        %510 = vmatpush1.bf16.msra.mxu0 %v423
        %511 = vmatprep.subr.bf16.mxu0 0
        %512 = vmatpush1.bf16.msra.mxu0 %v426
        %513 = vmatprep.subr.bf16.mxu0 0
        %514 = vmatpush1.bf16.msra.mxu0 %v429
        %515 = vmatprep.subr.bf16.mxu0 0
        %516 = vmatpush1.bf16.msra.mxu0 %v432
        %517 = vmatprep.subr.bf16.mxu0 0
        %518 = vmatpush1.bf16.msra.mxu0 %v435
        %519 = vmatprep.subr.bf16.mxu0 0
        %520 = vmatpush1.bf16.msra.mxu0 0
        %521 = vmatprep.subr.bf16.mxu0 0
        %522 = vmatpush1.bf16.msra.mxu0 0
        %523 = vmatprep.subr.bf16.mxu0 0
        %524 = vmatpush1.bf16.msra.mxu0 0
        %525 = vmatprep.subr.bf16.mxu0 0
        %526 = vmatpush1.bf16.msra.mxu0 0
        %527 = vmatprep.subr.bf16.mxu0 0
        %528 = vmatpush1.bf16.msra.mxu0 0
        %529 = vmatprep.subr.bf16.mxu0 0
        %530 = vmatpush1.bf16.msra.mxu0 0
        %531 = vmatprep.subr.bf16.mxu0 0
        %532 = vmatpush1.bf16.msra.mxu0 0
        %533 = vmatprep.subr.bf16.mxu0 0
        %534 = vmatpush1.bf16.msra.mxu0 0
        %535 = vmatprep.mubr.bf16.mxu0 0
        %536 = vmatmul.mubr.bf16.gmra.mrb[0].mxu0 %v330
        %v537 = vpop.f32.mrb[0].mxu0
        %v538 = vadd.f32 %v322, %v537
        %v539 = vpop.f32.mrb[0].mxu0
        %v540 = vpop.f32.mrb[0].mxu0
        %v541 = vadd.f32 %v322, %v540
        %v542 = vpop.f32.mrb[0].mxu0
        %543 = vdwg.mxu0
        %v544 = vpack.c.bf16 %v495, %v495
        %v545 = vpack.c.bf16 %v499, %v499
        %v546 = vpack.c.bf16 %v497, %v497
        %v547 = vpack.c.bf16 %v501, %v501
        %v548 = vpack.c.bf16 %v538, %v538
        %v549 = vpack.c.bf16 %v541, %v541
        %550 = vmatprep.subr.bf16.mxu0 0
        %551 = vmatpush1.bf16.xpose.msra.mxu0 %v546
        %552 = vmatprep.subr.bf16.mxu0 0
        %553 = vmatpush1.bf16.xpose.msra.mxu0 0
        %554 = vmatprep.subr.bf16.mxu0 0
        %555 = vmatpush1.bf16.xpose.msra.mxu0 0
        %556 = vmatprep.subr.bf16.mxu0 0
        %557 = vmatpush1.bf16.xpose.msra.mxu0 0
        %558 = vmatprep.subr.bf16.mxu0 0
        %559 = vmatpush1.bf16.xpose.msra.mxu0 0
        %560 = vmatprep.subr.bf16.mxu0 0
        %561 = vmatpush1.bf16.xpose.msra.mxu0 0
        %562 = vmatprep.subr.bf16.mxu0 0
        %563 = vmatpush1.bf16.xpose.msra.mxu0 0
        %564 = vmatprep.subr.bf16.mxu0 0
        %565 = vmatpush1.bf16.xpose.msra.mxu0 0
        %566 = vmatprep.subr.bf16.mxu0 0
        %567 = vmatpush1.bf16.xpose.msra.mxu0 0
        %568 = vmatprep.subr.bf16.mxu0 0
        %569 = vmatpush1.bf16.xpose.msra.mxu0 0
        %570 = vmatprep.subr.bf16.mxu0 0
        %571 = vmatpush1.bf16.xpose.msra.mxu0 0
        %572 = vmatprep.subr.bf16.mxu0 0
        %573 = vmatpush1.bf16.xpose.msra.mxu0 0
        %574 = vmatprep.subr.bf16.mxu0 0
        %575 = vmatpush1.bf16.xpose.msra.mxu0 0
        %576 = vmatprep.subr.bf16.mxu0 0
        %577 = vmatpush1.bf16.xpose.msra.mxu0 0
        %578 = vmatprep.subr.bf16.mxu0 0
        %579 = vmatpush1.bf16.xpose.msra.mxu0 0
        %580 = vmatprep.subr.bf16.mxu0 0
        %581 = vmatpush1.bf16.xpose.msra.mxu0 0
        %582 = vmatprep.mubr.bf16.mxu0 0
        %583 = vmatmul.mubr.bf16.gmra.mrb[0].mxu0 %v544
        %v584 = vpop.f32.mrb[0].mxu0
        %v585 = vadd.f32 0.0, %v584
        %v586 = vpop.f32.mrb[0].mxu0
        %v587 = vpop.f32.mrb[0].mxu0
        %v588 = vpop.f32.mrb[0].mxu0
        %589 = vdwg.mxu0
        %590 = vmatprep.subr.bf16.mxu0 0
        %591 = vmatpush1.bf16.xpose.msra.mxu0 %v547
        %592 = vmatprep.subr.bf16.mxu0 0
        %593 = vmatpush1.bf16.xpose.msra.mxu0 0
        %594 = vmatprep.subr.bf16.mxu0 0
        %595 = vmatpush1.bf16.xpose.msra.mxu0 0
        %596 = vmatprep.subr.bf16.mxu0 0
        %597 = vmatpush1.bf16.xpose.msra.mxu0 0
        %598 = vmatprep.subr.bf16.mxu0 0
        %599 = vmatpush1.bf16.xpose.msra.mxu0 0
        %600 = vmatprep.subr.bf16.mxu0 0
        %601 = vmatpush1.bf16.xpose.msra.mxu0 0
        %602 = vmatprep.subr.bf16.mxu0 0
        %603 = vmatpush1.bf16.xpose.msra.mxu0 0
        %604 = vmatprep.subr.bf16.mxu0 0
        %605 = vmatpush1.bf16.xpose.msra.mxu0 0
        %606 = vmatprep.subr.bf16.mxu0 0
        %607 = vmatpush1.bf16.xpose.msra.mxu0 0
        %608 = vmatprep.subr.bf16.mxu0 0
        %609 = vmatpush1.bf16.xpose.msra.mxu0 0
        %610 = vmatprep.subr.bf16.mxu0 0
        %611 = vmatpush1.bf16.xpose.msra.mxu0 0
        %612 = vmatprep.subr.bf16.mxu0 0
        %613 = vmatpush1.bf16.xpose.msra.mxu0 0
        %614 = vmatprep.subr.bf16.mxu0 0
        %615 = vmatpush1.bf16.xpose.msra.mxu0 0
        %616 = vmatprep.subr.bf16.mxu0 0
        %617 = vmatpush1.bf16.xpose.msra.mxu0 0
        %618 = vmatprep.subr.bf16.mxu0 0
        %619 = vmatpush1.bf16.xpose.msra.mxu0 0
        %620 = vmatprep.subr.bf16.mxu0 0
        %621 = vmatpush1.bf16.xpose.msra.mxu0 0
        %622 = vmatprep.mubr.bf16.mxu0 0
        %623 = vmatmul.mubr.bf16.gmra.mrb[0].mxu0 %v545
        %v624 = vpop.f32.mrb[0].mxu0
        %v625 = vadd.f32 0.0, %v624
        %v626 = vpop.f32.mrb[0].mxu0
        %v627 = vpop.f32.mrb[0].mxu0
        %v628 = vpop.f32.mrb[0].mxu0
        %629 = vdwg.mxu0
        %vm630 = vcmask 64512
        %v631 = vsel %vm630, %v585, -inf
        %632 = vmax.xlane.f32.xlu0 %v631
        %v633 = vpop.xlane.xlu0 %632
        %v634 = vsel %vm630, %v625, -inf
        %635 = vmax.xlane.f32.xlu0 %v634
        %v636 = vpop.xlane.xlu0 %635
        %v637 = vsub.f32 %v585, %v633
        %v638 = vsub.f32 %v625, %v636
        %v639 = vmul.f32 %v637, 1.442695
        %v640 = vpow.pop %v639
        %v641 = vmul.f32 %v638, 1.442695
        %v642 = vpow.pop %v641
        %v643 = vsel %vm630, %v640, 0.0
        %644 = vadd.xlane.f32.xlu0 %v643
        %v645 = vpop.xlane.xlu0 %644
        %v646 = vsel %vm630, %v642, 0.0
        %647 = vadd.xlane.f32.xlu0 %v646
        %v648 = vpop.xlane.xlu0 %647
        %v649 = vrcp.pop %v645
        %v650 = vrcp.pop %v648
        %v651 = vpack.c.bf16 %v640, %v640
        %v652 = vpack.c.bf16 %v642, %v642
        %v654 = vsel %vm630, %v651, 0
        %vm656 = vcmask 1043456
        %v658 = vsel %vm656, %v548, 0
        %660 = vmatprep.subr.bf16.mxu0 0
        %661 = vmatpush1.bf16.msra.mxu0 %v658
        %662 = vmatprep.subr.bf16.mxu0 0
        %663 = vmatpush1.bf16.msra.mxu0 0
        %664 = vmatprep.subr.bf16.mxu0 0
        %665 = vmatpush1.bf16.msra.mxu0 0
        %666 = vmatprep.subr.bf16.mxu0 0
        %667 = vmatpush1.bf16.msra.mxu0 0
        %668 = vmatprep.subr.bf16.mxu0 0
        %669 = vmatpush1.bf16.msra.mxu0 0
        %670 = vmatprep.subr.bf16.mxu0 0
        %671 = vmatpush1.bf16.msra.mxu0 0
        %672 = vmatprep.subr.bf16.mxu0 0
        %673 = vmatpush1.bf16.msra.mxu0 0
        %674 = vmatprep.subr.bf16.mxu0 0
        %675 = vmatpush1.bf16.msra.mxu0 0
        %676 = vmatprep.subr.bf16.mxu0 0
        %677 = vmatpush1.bf16.msra.mxu0 0
        %678 = vmatprep.subr.bf16.mxu0 0
        %679 = vmatpush1.bf16.msra.mxu0 0
        %680 = vmatprep.subr.bf16.mxu0 0
        %681 = vmatpush1.bf16.msra.mxu0 0
        %682 = vmatprep.subr.bf16.mxu0 0
        %683 = vmatpush1.bf16.msra.mxu0 0
        %684 = vmatprep.subr.bf16.mxu0 0
        %685 = vmatpush1.bf16.msra.mxu0 0
        %686 = vmatprep.subr.bf16.mxu0 0
        %687 = vmatpush1.bf16.msra.mxu0 0
        %688 = vmatprep.subr.bf16.mxu0 0
        %689 = vmatpush1.bf16.msra.mxu0 0
        %690 = vmatprep.subr.bf16.mxu0 0
        %691 = vmatpush1.bf16.msra.mxu0 0
        %692 = vmatprep.mubr.bf16.mxu0 0
        %693 = vmatmul.mubr.bf16.gmra.mrb[0].mxu0 %v654
        %v694 = vpop.f32.mrb[0].mxu0
        %v695 = vadd.f32 0.0, %v694
        %v696 = vpop.f32.mrb[0].mxu0
        %v697 = vpop.f32.mrb[0].mxu0
        %v698 = vpop.f32.mrb[0].mxu0
        %699 = vdwg.mxu0
        %v701 = vsel %vm630, %v652, 0
        %v704 = vsel %vm656, %v549, 0
        %706 = vmatprep.subr.bf16.mxu0 0
        %707 = vmatpush1.bf16.msra.mxu0 %v704
        %708 = vmatprep.subr.bf16.mxu0 0
        %709 = vmatpush1.bf16.msra.mxu0 0
        %710 = vmatprep.subr.bf16.mxu0 0
        %711 = vmatpush1.bf16.msra.mxu0 0
        %712 = vmatprep.subr.bf16.mxu0 0
        %713 = vmatpush1.bf16.msra.mxu0 0
        %714 = vmatprep.subr.bf16.mxu0 0
        %715 = vmatpush1.bf16.msra.mxu0 0
        %716 = vmatprep.subr.bf16.mxu0 0
        %717 = vmatpush1.bf16.msra.mxu0 0
        %718 = vmatprep.subr.bf16.mxu0 0
        %719 = vmatpush1.bf16.msra.mxu0 0
        %720 = vmatprep.subr.bf16.mxu0 0
        %721 = vmatpush1.bf16.msra.mxu0 0
        %722 = vmatprep.subr.bf16.mxu0 0
        %723 = vmatpush1.bf16.msra.mxu0 0
        %724 = vmatprep.subr.bf16.mxu0 0
        %725 = vmatpush1.bf16.msra.mxu0 0
        %726 = vmatprep.subr.bf16.mxu0 0
        %727 = vmatpush1.bf16.msra.mxu0 0
        %728 = vmatprep.subr.bf16.mxu0 0
        %729 = vmatpush1.bf16.msra.mxu0 0
        %730 = vmatprep.subr.bf16.mxu0 0
        %731 = vmatpush1.bf16.msra.mxu0 0
        %732 = vmatprep.subr.bf16.mxu0 0
        %733 = vmatpush1.bf16.msra.mxu0 0
        %734 = vmatprep.subr.bf16.mxu0 0
        %735 = vmatpush1.bf16.msra.mxu0 0
        %736 = vmatprep.subr.bf16.mxu0 0
        %737 = vmatpush1.bf16.msra.mxu0 0
        %738 = vmatprep.mubr.bf16.mxu0 0
        %739 = vmatmul.mubr.bf16.gmra.mrb[0].mxu0 %v701
        %v740 = vpop.f32.mrb[0].mxu0
        %v741 = vadd.f32 0.0, %v740
        %v742 = vpop.f32.mrb[0].mxu0
        %v743 = vpop.f32.mrb[0].mxu0
        %v744 = vpop.f32.mrb[0].mxu0
        %745 = vdwg.mxu0
        %v746 = vmul.f32 %v695, %v649
        %v747 = vmul.f32 %v741, %v650
        %v748 = vpack.c.bf16 %v747, %v746
        %v749 = vld [vmem:[#allocation7] sm:$0xf]
        %v750 = vld [vmem:[#allocation7 + $0x4] sm:$0xf]
        %v751 = vld [vmem:[#allocation7 + $0x8] sm:$0xf]
        %v752 = vld [vmem:[#allocation7 + $0xc] sm:$0xf]
        %v753 = vld [vmem:[#allocation7 + $0x10] sm:$0xf]
        %v754 = vld [vmem:[#allocation7 + $0x14] sm:$0xf]
        %v755 = vld [vmem:[#allocation7 + $0x18] sm:$0xf]
        %v756 = vld [vmem:[#allocation7 + $0x1c] sm:$0xf]
        %v757 = vld [vmem:[#allocation7 + $0x20] sm:$0xf]
        %v758 = vld [vmem:[#allocation7 + $0x24] sm:$0xf]
        %v759 = vld [vmem:[#allocation7 + $0x28] sm:$0xf]
        %v760 = vld [vmem:[#allocation7 + $0x2c] sm:$0xf]
        %v761 = vld [vmem:[#allocation7 + $0x30] sm:$0xf]
        %v762 = vld [vmem:[#allocation7 + $0x34] sm:$0xf]
        %v763 = vld [vmem:[#allocation7 + $0x38] sm:$0xf]
        %v764 = vld [vmem:[#allocation7 + $0x3c] sm:$0xf]
        %v765 = vld [vmem:[%s4] sm:$0x1]
        %v767 = vlaneseq
        %v768 = vshrl.u32 %v767, 7
        %v769 = vsub.s32 0, %v768
        %v770 = vrot.slane %v765, %v769
        %v788 = vunpack.c.l.b16 %v749
        %v789 = vunpack.c.l.b16 %v750
        %v790 = vunpack.c.l.b16 %v751
        %v791 = vunpack.c.l.b16 %v752
        %v792 = vunpack.c.l.b16 %v753
        %v793 = vunpack.c.l.b16 %v754
        %v794 = vunpack.c.l.b16 %v755
        %v795 = vunpack.c.l.b16 %v756
        %v796 = vunpack.c.l.b16 %v757
        %v797 = vunpack.c.l.b16 %v758
        %v798 = vunpack.c.l.b16 %v759
        %v799 = vunpack.c.l.b16 %v760
        %v800 = vunpack.c.l.b16 %v761
        %v801 = vunpack.c.l.b16 %v762
        %v802 = vunpack.c.l.b16 %v763
        %v803 = vunpack.c.l.b16 %v764
        %v804 = vpack.c.b16 %v789, %v788
        %v805 = vpack.c.b16 %v791, %v790
        %v806 = vpack.c.b16 %v793, %v792
        %v807 = vpack.c.b16 %v795, %v794
        %v808 = vpack.c.b16 %v797, %v796
        %v809 = vpack.c.b16 %v799, %v798
        %v810 = vpack.c.b16 %v801, %v800
        %v811 = vpack.c.b16 %v803, %v802
        %820 = vmatprep.subr.bf16.mxu0 0
        %821 = vmatpush1.bf16.msra.mxu0 %v804
        %822 = vmatprep.subr.bf16.mxu0 0
        %823 = vmatpush1.bf16.msra.mxu0 %v805
        %824 = vmatprep.subr.bf16.mxu0 0
        %825 = vmatpush1.bf16.msra.mxu0 %v806
        %826 = vmatprep.subr.bf16.mxu0 0
        %827 = vmatpush1.bf16.msra.mxu0 %v807
        %828 = vmatprep.subr.bf16.mxu0 0
        %829 = vmatpush1.bf16.msra.mxu0 %v808
        %830 = vmatprep.subr.bf16.mxu0 0
        %831 = vmatpush1.bf16.msra.mxu0 %v809
        %832 = vmatprep.subr.bf16.mxu0 0
        %833 = vmatpush1.bf16.msra.mxu0 %v810
        %834 = vmatprep.subr.bf16.mxu0 0
        %835 = vmatpush1.bf16.msra.mxu0 %v811
        %836 = vmatprep.subr.bf16.mxu0 0
        %837 = vmatpush1.bf16.msra.mxu0 0
        %838 = vmatprep.subr.bf16.mxu0 0
        %839 = vmatpush1.bf16.msra.mxu0 0
        %840 = vmatprep.subr.bf16.mxu0 0
        %841 = vmatpush1.bf16.msra.mxu0 0
        %842 = vmatprep.subr.bf16.mxu0 0
        %843 = vmatpush1.bf16.msra.mxu0 0
        %844 = vmatprep.subr.bf16.mxu0 0
        %845 = vmatpush1.bf16.msra.mxu0 0
        %846 = vmatprep.subr.bf16.mxu0 0
        %847 = vmatpush1.bf16.msra.mxu0 0
        %848 = vmatprep.subr.bf16.mxu0 0
        %849 = vmatpush1.bf16.msra.mxu0 0
        %850 = vmatprep.subr.bf16.mxu0 0
        %851 = vmatpush1.bf16.msra.mxu0 0
        %852 = vmatprep.mubr.bf16.mxu0 0
        %853 = vmatmul.mubr.bf16.gmra.mrb[0].mxu0 %v748
        %v854 = vpop.f32.mrb[0].mxu0
        %v855 = vadd.f32 %v770, %v854
        %v856 = vpop.f32.mrb[0].mxu0
        %v857 = vpop.f32.mrb[0].mxu0
        %v858 = vadd.f32 %v770, %v857
        %v859 = vpop.f32.mrb[0].mxu0
        %860 = vdwg.mxu0
        %861 = vst [vmem:[%s271] sm:$0xff] %v855
        %862 = vst [vmem:[%s271 + $0x8] sm:$0xff] %v858
        %s863 = sand.u32 %s141, 1
        %s864 = scalar_lea.sflag [#allocation4], %s863
        %s865 = sand.u32 %s141, 1
        %s866 = smul.addr %s865, 16
        %s867 = scalar_lea.vmem [#allocation8], %s866
        // Predicated region
        $region53: #{tpu_custom_call.1} parent=39 // pred_check
          %p868 = pneg %p151
        $region54: #{tpu_custom_call.1} parent=39 // pred_check_branch
          %870 = sbr.rel (%p868) target = $region56
        $region55: #{tpu_custom_call.1} parent=39 // pred_region
          %s871 = smul.u32 2, %s23
          %s873 = ssub.s32 256, 256
          %874 = vsyncadd %s864, %s873
          %s875 = smul.addr %s871, 128
          %s876 = scalar_lea.hbm %s5, %s875
          %s877 = sshll.u32 %s867, 4
          %s878 = int_to_ptr.vmem [resolvable:$true] %s877
          %883 = dma.vmem_to_hbm [thread:$0]  %s878, 256, %s876, %s864, 128, 128, 8
        $region56: #{tpu_custom_call.1} parent=39 // pred_fallthru
          _
      $region40: #{tpu_custom_call.1} parent=5 // pred_fallthru
        _
      %p884 = scmp.le.s32.totalorder 2, %s18
      // Predicated region
      $region57: #{tpu_custom_call.1} parent=5 // pred_check
        %p885 = pneg %p884
      $region58: #{tpu_custom_call.1} parent=5 // pred_check_branch
        %887 = sbr.rel (%p885) target = $region60
      $region59: #{tpu_custom_call.1} parent=5 // pred_region
        %s888 = ssub.s32 %s18, 2
        // Predicated region
        $region61: #{tpu_custom_call.1} parent=59 // pred_check
          %p889 = pneg %p157
        $region62: #{tpu_custom_call.1} parent=59 // pred_check_branch
          %891 = sbr.rel (%p889) target = $region64
        $region63: #{tpu_custom_call.1} parent=59 // pred_region
          %s892 = sand.u32 %s142, 1
          %s893 = scalar_lea.sflag [#allocation4], %s892
          %s894 = sand.u32 %s142, 1
          %s895 = smul.addr %s894, 16
          %s896 = scalar_lea.vmem [#allocation8], %s895
          %897 = dma.done %s893, 256
        $region64: #{tpu_custom_call.1} parent=59 // pred_fallthru
          _
      $region60: #{tpu_custom_call.1} parent=5 // pred_fallthru
        _
    $region6: #{tpu_custom_call.1} parent=1 // loop_footer
      %s22 = sadd.s32 1, %s18
    $region7: #{tpu_custom_call.1} parent=1 // loop_footer_branch
      %17 = sbr.rel target = $region3
    $region8: #{tpu_custom_call.1} parent=1 // loop_exit
      _
    %898 = vsyncpa [#allocation3], 1
    %s899 = scalar_lea.sflag [#allocation3], 1
    %900 = vsyncpa %s899, 1
    %901 = vsyncpa [#allocation6], 1
    %902 = vsyncpa [#allocation4], 1
    %s903 = scalar_lea.sflag [#allocation4], 1
    %904 = vsyncpa %s903, 1

</llo_original>
